<compile_context>
chip_gen: v7x
topology: tpu7x:2x2x1
jax: 0.10.0
libtpu: 0.0.40
codegen_flags: <defaults>
</compile_context>

<pallas_src>
import functools

import jax
import jax.numpy as jnp
from jax import lax
from jax.experimental import pallas as pl
from jax.experimental.pallas import tpu as pltpu

_LANE = 128


def _cdiv(a, b):
    return -(-a // b)


def _linear_kernel(x_ref, w_ref, b_ref, o_ref, *, num_k, tk, d_total):
    # x_ref: [TB, TK] VMEM batch/feature tile, w_ref: [1, TK] VMEM,
    # b_ref: [1] SMEM scalar, o_ref: [TB, 1] VMEM (resident across the K axis).
    xv = x_ref[...].astype(jnp.float32)          # no-op for f32; f32 accumulation for bf16
    wv = w_ref[...].astype(jnp.float32)
    prod = xv * wv                               # VPU broadcast multiply   [TB, TK]

    if d_total % tk != 0:
        # Mask the feature-axis tail of the last (partial) K block: clipped blocks leave
        # stale data in the out-of-range columns, which must not enter the reduction.
        col = lax.broadcasted_iota(jnp.int32, prod.shape, 1) + pl.program_id(1) * tk
        prod = jnp.where(col < d_total, prod, jnp.float32(0))

    partial = jnp.sum(prod, axis=-1, keepdims=True)   # XLU cross-lane reduce  [TB, 1]

    if num_k == 1:
        o_ref[...] = partial + b_ref[0]
    else:
        k = pl.program_id(1)

        @pl.when(k == 0)
        def _init():
            o_ref[...] = jnp.zeros_like(o_ref)

        o_ref[...] += partial

        @pl.when(k == num_k - 1)
        def _finalize():
            o_ref[...] += b_ref[0]


def _vmem_limits():
    """(per-block byte target for the streaming x tiles, explicit scoped-VMEM limit)."""
    try:
        cap = int(pltpu.get_tpu_info().vmem_capacity_bytes)
    except Exception:  # pragma: no cover - conservative fallback (v7x per-TC size)
        cap = 64 * 1024 * 1024
    # >= ~2 MiB blocks reach ~85% of HBM roofline; cap so double-buffering + weight /
    # output / compiler scratch stay well inside VMEM (v5e/v6e: 128 MiB, v7x: 64 MiB/TC).
    block_target = max(2 * 1024 * 1024, min(16 * 1024 * 1024, cap // 6))
    # v5e's default scoped limit is only 16 MiB -> always set the limit explicitly.
    vmem_limit = min(int(cap * 0.75), 96 * 1024 * 1024)
    return block_target, vmem_limit


def _pick_tiles(batch, in_dims, itemsize, block_target):
    """Choose (batch_tile, num_batch_tiles, k_tile, num_k_tiles), sized by bytes."""
    row_bytes = in_dims * itemsize

    # Feature (reduction) axis: keep whole rows unless even a 128-row block would blow
    # the byte target; then tile K in multiples of 128 lanes (tail masked in-kernel) so
    # the batch tile can stay ~512 rows and per-step VMEM stays bounded on v7x.
    if _LANE * row_bytes <= block_target:
        tk = in_dims
    else:
        tk = (block_target // (512 * itemsize)) // _LANE * _LANE
        tk = max(_LANE, min(tk, in_dims))
    num_k = _cdiv(in_dims, tk)

    # Batch tile: fill the byte target, lane-aligned so multi-tile blocks satisfy the
    # (8, 128) block constraint; keep >= 2 tiles when there is enough work so the
    # "parallel" axis can feed both TensorCores on v7x.
    tb = max(_LANE, (block_target // (tk * itemsize)) // _LANE * _LANE)
    if batch >= 2 * _LANE:
        tb = min(tb, _cdiv(_cdiv(batch, 2), _LANE) * _LANE)
    if tb >= batch:
        tb = batch  # single full-extent block (any batch size is legal here)
    num_b = _cdiv(batch, tb)
    return tb, num_b, tk, num_k


def one_layer_nn_forward(x, w, b, *, block_target_bytes=None):
    """x: [B, D], w: [1, D] f32 (lane-dense), b: [1] f32 -> [B, 1] f32."""
    x = jnp.asarray(x)
    if not jnp.issubdtype(x.dtype, jnp.floating):
        x = x.astype(jnp.float32)  # mirrors torch.tensor(x, dtype=torch.float32)
    w = jnp.asarray(w, dtype=jnp.float32)
    b = jnp.asarray(b, dtype=jnp.float32)

    B, D = x.shape
    itemsize = x.dtype.itemsize

    block_target, vmem_limit = _vmem_limits()
    if block_target_bytes is not None:
        block_target = int(block_target_bytes)

    tb, num_b, tk, num_k = _pick_tiles(B, D, itemsize, block_target)

    kernel = functools.partial(_linear_kernel, num_k=num_k, tk=tk, d_total=D)

    out = pl.pallas_call(
        kernel,
        out_shape=jax.ShapeDtypeStruct((B, 1), jnp.float32),
        grid=(num_b, num_k),
        in_specs=[
            pl.BlockSpec((tb, tk), lambda i, k: (i, k)),            # x: streamed tiles
            pl.BlockSpec((1, tk), lambda i, k: (0, k)),             # w: lane-dense row
            pl.BlockSpec(memory_space=pltpu.MemorySpace.SMEM),      # b: scalar in SMEM
        ],
        out_specs=pl.BlockSpec((tb, 1), lambda i, k: (i, 0)),       # resident across K
        compiler_params=pltpu.CompilerParams(
            dimension_semantics=("parallel", "arbitrary"),          # batch || , K reduce
            vmem_limit_bytes=vmem_limit,
        ),
    )(x, w, b)
    return out


def init_params(in_dims, key):
    """Match nn.Linear default init U(-1/sqrt(D), 1/sqrt(D)); weight stored as [1, D]."""
    kw, kb = jax.random.split(key)
    bound = 1.0 / jnp.sqrt(jnp.float32(in_dims))
    w = jax.random.uniform(kw, (1, in_dims), jnp.float32, -bound, bound)
    b = jax.random.uniform(kb, (1,), jnp.float32, -bound, bound)
    return w, b


if __name__ == "__main__":
    key = jax.random.PRNGKey(0)
    k_x, k_p, k_x2, k_p2 = jax.random.split(key, 4)

    # Small canonical shape (module forward: x [batch, in_dims] -> [batch, 1]).
    batch, in_dims = 8, 32
    x = jax.random.normal(k_x, (batch, in_dims), dtype=jnp.float32)
    w, b = init_params(in_dims, k_p)
    out = jax.block_until_ready(one_layer_nn_forward(x, w, b))
    ref = x @ w.T + b[None, :]
    assert out.shape == (batch, 1)
    assert jnp.allclose(out, ref, atol=1e-5, rtol=1e-5)

    # Exercise the multi-batch-tile, K-tiled and masked-tail paths by forcing a tiny
    # per-block byte target (same code path large-D inputs take on real budgets).
    batch2, in_dims2 = 300, 200
    x2 = jax.random.normal(k_x2, (batch2, in_dims2), dtype=jnp.float32)
    w2, b2 = init_params(in_dims2, k_p2)
    out2 = jax.block_until_ready(
        one_layer_nn_forward(x2, w2, b2, block_target_bytes=64 * 1024))
    ref2 = x2 @ w2.T + b2[None, :]
    assert out2.shape == (batch2, 1)
    assert jnp.allclose(out2, ref2, atol=1e-4, rtol=1e-4)

    print("KERNEL_OK")
</pallas_src>

<mosaic_0001>
module attributes {stable_mosaic.version = 11 : i64} {
  func.func @_linear_kernel(%arg0: i32, %arg1: i32, %arg2: memref<8x32xf32, #tpu.memory_space<vmem>>, %arg3: memref<1x32xf32, #tpu.memory_space<vmem>>, %arg4: memref<1xf32, #tpu.memory_space<smem>>, %arg5: memref<8x1xf32, #tpu.memory_space<vmem>>) attributes {dimension_semantics = [#tpu.dimension_semantics<parallel>, #tpu.dimension_semantics<arbitrary>], iteration_bounds = array<i64: 1, 1>, scalar_prefetch = 0 : i64, scratch_operands = 0 : i64, tpu.core_type = #tpu.core_type<tc>, window_params = [{transform_indices = @transform_0, window_bounds = array<i64: 8, 32>}, {transform_indices = @transform_1, window_bounds = array<i64: 1, 32>}, {transform_indices = @transform_2, window_bounds = array<i64: 1>}, {transform_indices = @transform_3, window_bounds = array<i64: 8, 1>}]} {
    %c0 = arith.constant 0 : index
    %c0_0 = arith.constant 0 : index
    %0 = vector.load %arg2[%c0, %c0_0] : memref<8x32xf32, #tpu.memory_space<vmem>>, vector<8x32xf32>
    %c0_1 = arith.constant 0 : index
    %c0_2 = arith.constant 0 : index
    %1 = vector.load %arg3[%c0_1, %c0_2] : memref<1x32xf32, #tpu.memory_space<vmem>>, vector<1x32xf32>
    %2 = vector.broadcast %1 : vector<1x32xf32> to vector<8x32xf32>
    %3 = arith.mulf %0, %2 : vector<8x32xf32>
    %cst = arith.constant dense<0.000000e+00> : vector<8xf32>
    %4 = vector.multi_reduction <add>, %3, %cst [1] : vector<8x32xf32> to vector<8xf32>
    %5 = vector.shape_cast %4 : vector<8xf32> to vector<8x1xf32>
    %c0_3 = arith.constant 0 : index
    %6 = memref.load %arg4[%c0_3] : memref<1xf32, #tpu.memory_space<smem>>
    %7 = vector.broadcast %6 : f32 to vector<8x1xf32>
    %8 = arith.addf %5, %7 : vector<8x1xf32>
    %c0_4 = arith.constant 0 : index
    %c0_5 = arith.constant 0 : index
    %9 = vector.load %arg5[%c0_4, %c0_5] : memref<8x1xf32, #tpu.memory_space<vmem>>, vector<8x1xf32>
    tpu.vector_store %arg5[%c0_4, %c0_5], %8 {strides = array<i32>} : memref<8x1xf32, #tpu.memory_space<vmem>>, vector<8x1xf32>,
    return
  }
  func.func @transform_0(%arg0: i32, %arg1: i32) -> (i32, i32) {
    %c0_i32 = arith.constant 0 : i32
    return %arg0, %arg1 : i32, i32
  }
  func.func @transform_1(%arg0: i32, %arg1: i32) -> (i32, i32) {
    %c0_i32 = arith.constant 0 : i32
    %c0_i32_0 = arith.constant 0 : i32
    return %c0_i32, %arg1 : i32, i32
  }
  func.func @transform_2(%arg0: i32, %arg1: i32) -> i32 {
    %c0_i32 = arith.constant 0 : i32
    %c0_i32_0 = arith.constant 0 : i32
    return %c0_i32 : i32
  }
  func.func @transform_3(%arg0: i32, %arg1: i32) -> (i32, i32) {
    %c0_i32 = arith.constant 0 : i32
    %c0_i32_0 = arith.constant 0 : i32
    return %arg0, %c0_i32 : i32, i32
  }
}

</mosaic_0001>

<llo_original>
// kernel: tpu_custom_call.1
$region0: #{tpu_custom_call.1}
  #allocation0 [shape = 'u32[]', space=smem, size = 0x4, offset = 0x4, fixed_abs, tag = 'smem constant byte address 0x4 - core index']
  #allocation1 [shape = 'u32[144,128]{1,0:T(1,128)}', space=vmem, size = 0x12000, scoped, tag = 'internal scratch']
  #allocation2 [shape = 'f32[1]{0:T(128)S(6)}', space=smem, size = 0x200, scoped, tag = 'scoped memory for tpu_custom_call.1']
  %s0 = inlined_call_operand.hbm [shape: f32[8,32], index: 0, kind: input, shape index: {}]
  %s1 = inlined_call_operand.vmem [shape: f32[1,32], index: 1, kind: input, shape index: {}]
  %s2 = inlined_call_operand.<no memory space> [shape: f32[1], index: 2, kind: input, shape index: {}]
  %s3 = inlined_call_operand.vmem [shape: f32[8,1], index: 3, kind: output, shape index: {}]
  %s4 = sld [smem:[#allocation0]]
  $region26: #{tpu_custom_call.1} parent=0
    _
  %s6 = ssub.s32 1, %s4
  %s7 = scalar_select 0, %s6, %s4
  %8 = sst [smem:[#allocation2]] %s2
  $region1: #{tpu_custom_call.1} parent=0
    #allocation3 [shape = 'u8[4096]{0}', space=vmem, size = 0x1000, scoped, tag = 'input window, operand 0, single buffered']
    #allocation4 [shape = 's32[1]{0}', space=sflag, size = 0x4, scoped, tag = 'scoped memory for tpu_custom_call.1']
    %9 = vsyncpa [#allocation4], 0
    // Predicated region
    $region2: #{tpu_custom_call.1} parent=1 // pred_check
      _
    $region3: #{tpu_custom_call.1} parent=1 // pred_check_branch
      %11 = sbr.rel (0) target = $region5
    $region4: #{tpu_custom_call.1} parent=1 // pred_region
      %s13 = ssub.s32 128, 128
      %14 = vsyncadd [#allocation4], %s13
      %s16 = sshll.u32 [#allocation3], 4
      %s17 = int_to_ptr.vmem [resolvable:$true] %s16
      %19 = dma.hbm_to_vmem [thread:$0]  %s0, 128, %s17, [#allocation4]
    $region5: #{tpu_custom_call.1} parent=1 // pred_fallthru
      _
    // Predicated region
    $region6: #{tpu_custom_call.1} parent=1 // pred_check
      _
    $region7: #{tpu_custom_call.1} parent=1 // pred_check_branch
      %21 = sbr.rel (0) target = $region9
    $region8: #{tpu_custom_call.1} parent=1 // pred_region
      _
    $region9: #{tpu_custom_call.1} parent=1 // pred_fallthru
      _
    // Predicated region
    $region10: #{tpu_custom_call.1} parent=1 // pred_check
      _
    $region11: #{tpu_custom_call.1} parent=1 // pred_check_branch
      %23 = sbr.rel (0) target = $region13
    $region12: #{tpu_custom_call.1} parent=1 // pred_region
      _
    $region13: #{tpu_custom_call.1} parent=1 // pred_fallthru
      _
    // Predicated region
    $region14: #{tpu_custom_call.1} parent=1 // pred_check
      _
    $region15: #{tpu_custom_call.1} parent=1 // pred_check_branch
      %25 = sbr.rel (0) target = $region17
    $region16: #{tpu_custom_call.1} parent=1 // pred_region
      %26 = dma.done [#allocation4], 128
    $region17: #{tpu_custom_call.1} parent=1 // pred_fallthru
      _
    %v27 = vld [vmem:[#allocation3] sm:$0xff]
    %v28 = vld [vmem:[%s1] sm:$0x1]
    %v30 = vlaneseq
    %v31 = vshrl.u32 %v30, 7
    %v32 = vsub.s32 0, %v31
    %v33 = vrot.slane %v28, %v32
    %v35 = vmul.f32 %v27, %v33
    %vm36 = vcmask 261120
    %v37 = vsel %vm36, %v35, 0.0
    %38 = vadd.xlane.f32.xlu0 %v37
    %v39 = vpop.xlane.xlu0 %38
    %s40 = sld [smem:[#allocation2]]
    %v41 = vstv %s40
    %v42 = vadd.f32 %v39, %v41
    %vm43 = vcmask 7168
    %44 = vst.msk [vmem:[%s3] sm:$0xff] %vm43, %v42
    // Predicated region
    $region18: #{tpu_custom_call.1} parent=1 // pred_check
      _
    $region19: #{tpu_custom_call.1} parent=1 // pred_check_branch
      %46 = sbr.rel (0) target = $region21
    $region20: #{tpu_custom_call.1} parent=1 // pred_region
      _
    $region21: #{tpu_custom_call.1} parent=1 // pred_fallthru
      _
    // Predicated region
    $region22: #{tpu_custom_call.1} parent=1 // pred_check
      _
    $region23: #{tpu_custom_call.1} parent=1 // pred_check_branch
      %48 = sbr.rel (0) target = $region25
    $region24: #{tpu_custom_call.1} parent=1 // pred_region
      _
    $region25: #{tpu_custom_call.1} parent=1 // pred_fallthru
      _
    %49 = vsyncpa [#allocation4], 1

</llo_original>
